<compile_context>
chip_gen: v6e
topology: v6e:2x2x1
jax: 0.10.0
libtpu: 0.0.40
codegen_flags: <defaults>
</compile_context>

<pallas_src>
import jax
import jax.numpy as jnp
from jax.experimental import pallas as pl
from jax.experimental.pallas import tpu as pltpu


def _round_up(v, m):
    return (v + m - 1) // m * m


def _round_down(v, m):
    return (v // m) * m


def classifier_kernel(x_ref, w1_ref, b1_ref, w2_ref, b2_ref, out_ref):
    # x_ref : (1, batch_p, nhid)  -- last timestep tile (selected by index_map)
    # w1_ref: (nhid, 10)          -- fc weight, kernel layout (in, out)
    # b1_ref: (1, 10)             -- f32
    # w2_ref: (10, TN)            -- decoder weight tile along padded ntoken
    # b2_ref: (1, TN)             -- f32 (zero in padded columns)
    # out_ref: (batch_p, TN)      -- lane-dense (ntoken on lanes)
    x = x_ref[0]                                            # (batch_p, nhid)
    h = jnp.dot(x.astype(w1_ref.dtype), w1_ref[...],
                preferred_element_type=jnp.float32)         # (batch_p, 10)  MXU
    h = jnp.maximum(h + b1_ref[...], 0.0)                   # f32 bias+ReLU (VPU)
    d = jnp.dot(h.astype(w2_ref.dtype), w2_ref[...],
                preferred_element_type=jnp.float32)         # (batch_p, TN)  MXU
    out_ref[...] = (d + b2_ref[...]).astype(out_ref.dtype)  # unmasked lane-dense store


def prepare_params(w_fc, b_fc, w_dec, b_dec, weight_dtype=None):
    """One-time layout fix + ntoken padding (NOT in the per-forward path).

    Inputs are in PyTorch nn.Linear layout: weight (out, in), bias (out,).
    weight_dtype=jnp.bfloat16 halves streamed decoder-weight bytes and is
    safe on v5e/v6e/v7x (MXU takes bf16 with f32 accumulation; biases and
    elementwise math stay f32).  Keep f32 for strict parity tests.

    Returns (w1, b1, w2_padded, b2_padded, ntoken).
    """
    w1 = jnp.asarray(w_fc).T                                   # (nhid, 10)
    b1 = jnp.asarray(b_fc).reshape(1, -1).astype(jnp.float32)  # (1, 10)
    w2 = jnp.asarray(w_dec).T                                  # (10, ntoken)
    b2 = jnp.asarray(b_dec).reshape(1, -1).astype(jnp.float32)  # (1, ntoken)

    ntoken = w2.shape[1]
    ntoken_p = _round_up(ntoken, 128)
    if ntoken_p != ntoken:
        w2 = jnp.pad(w2, ((0, 0), (0, ntoken_p - ntoken)))
        b2 = jnp.pad(b2, ((0, 0), (0, ntoken_p - ntoken)))      # padded cols = 0

    if weight_dtype is not None:
        w1 = w1.astype(weight_dtype)
        w2 = w2.astype(weight_dtype)
    return w1, b1, w2, b2, ntoken


def classifier_forward(x, w1, b1, w2, b2, ntoken=None, *,
                       max_tile_n=4096, transpose=True):
    """x: (seq, batch, nhid); params from prepare_params.

    Returns (ntoken, batch) when transpose=True (PyTorch parity), else the
    lane-dense (batch, ntoken) layout (preferred for large vocab consumers).
    """
    seq, batch, nhid = x.shape
    hid = w1.shape[1]            # 10
    ntoken_p = w2.shape[1]       # padded to a multiple of 128
    if ntoken is None:
        ntoken = ntoken_p

    # Pad batch to a sublane multiple of 8 so output stores are never
    # sublane-masked (matters most on v5e's single vst slot).
    batch_p = _round_up(max(batch, 1), 8)
    if batch_p != batch:
        x = jnp.pad(x, ((0, 0), (0, batch_p - batch), (0, 0)))

    # ntoken tile: large to amortize the ~0.35 us per-grid-step overhead, but
    # keep >= 4 grid steps when the vocab is big enough (>= 2 steps per TC on
    # v7x -> megacore split + double-buffer overlap). Always a multiple of 128.
    tn = min(max_tile_n, ntoken_p)
    if ntoken_p >= 4 * 128:
        tn = min(tn, max(_round_down(ntoken_p // 4, 128), 128))
    grid = (pl.cdiv(ntoken_p, tn),)

    w_bytes = jnp.dtype(w2.dtype).itemsize
    x_bytes = jnp.dtype(x.dtype).itemsize
    cost = pl.CostEstimate(
        flops=2 * batch_p * (nhid * hid + hid * ntoken_p),
        transcendentals=0,
        bytes_accessed=(batch_p * nhid * x_bytes                  # last timestep
                        + (nhid * hid + hid * ntoken_p) * w_bytes  # weights
                        + (hid + ntoken_p) * 4                     # biases
                        + batch_p * ntoken_p * 4),                 # output
    )

    out_bn = pl.pallas_call(
        classifier_kernel,
        out_shape=jax.ShapeDtypeStruct((batch_p, ntoken_p), x.dtype),
        grid=grid,
        in_specs=[
            # Last timestep pulled directly out of the full input by the DMA.
            pl.BlockSpec((1, batch_p, nhid), lambda j: (seq - 1, 0, 0)),
            # Tiny grid-invariant operands: fetched once, stay resident.
            pl.BlockSpec((nhid, hid), lambda j: (0, 0)),
            pl.BlockSpec((1, hid), lambda j: (0, 0)),
            # Streamed / tiled decoder weight + bias (double-buffered).
            pl.BlockSpec((hid, tn), lambda j: (0, j)),
            pl.BlockSpec((1, tn), lambda j: (0, j)),
        ],
        out_specs=pl.BlockSpec((batch_p, tn), lambda j: (0, j)),
        compiler_params=pltpu.CompilerParams(
            dimension_semantics=("parallel",),     # v7x: 2 TCs split ntoken loop
            vmem_limit_bytes=32 * 1024 * 1024,     # fits v7x's 64 MiB with headroom
        ),
        cost_estimate=cost,
    )(x, w1, b1, w2, b2)

    # Slice off batch/vocab padding on the small result.
    out_bn = out_bn[:batch, :ntoken]
    if transpose:
        # PyTorch-parity layout (ntoken, batch). For large vocab, prefer
        # transpose=False and consume the lane-dense (batch, ntoken) result.
        return out_bn.T
    return out_bn


if __name__ == "__main__":
    # Small, deterministic example shapes consistent with the module.
    seq, batch, nhid, ntoken = 8, 4, 32, 16

    key = jax.random.PRNGKey(0)
    k_x, k_w1, k_b1, k_w2, k_b2 = jax.random.split(key, 5)

    x = jax.random.normal(k_x, (seq, batch, nhid), dtype=jnp.float32)
    # Parameters in PyTorch nn.Linear layout: weight (out, in), bias (out,)
    w_fc = jax.random.normal(k_w1, (10, nhid), dtype=jnp.float32) * 0.1
    b_fc = jax.random.normal(k_b1, (10,), dtype=jnp.float32) * 0.1
    w_dec = jax.random.normal(k_w2, (ntoken, 10), dtype=jnp.float32) * 0.1
    b_dec = jax.random.normal(k_b2, (ntoken,), dtype=jnp.float32) * 0.1

    # One-time param layout fix + ntoken padding (outside per-forward path).
    # f32 weights here for exact parity with the reference; pass
    # weight_dtype=jnp.bfloat16 when benchmarking streamed-weight bandwidth.
    params = prepare_params(w_fc, b_fc, w_dec, b_dec)

    out = classifier_forward(x, *params)
    out = jax.block_until_ready(out)

    # Pure-JAX reference (mirrors the PyTorch forward exactly).
    h_ref = jnp.maximum(jnp.einsum("sbh,oh->sbo", x, w_fc) + b_fc, 0.0)
    d_ref = (h_ref[-1, :, :] @ w_dec.T + b_dec).T
    assert out.shape == (ntoken, batch), out.shape
    assert jnp.allclose(out, d_ref, atol=1e-5, rtol=1e-5), "mismatch vs reference"

    print("KERNEL_OK")
</pallas_src>

<mosaic_0001>
module attributes {stable_mosaic.version = 11 : i64} {
  func.func @classifier_kernel(%arg0: i32, %arg1: memref<1x8x32xf32, #tpu.memory_space<vmem>>, %arg2: memref<32x10xf32, #tpu.memory_space<vmem>>, %arg3: memref<1x10xf32, #tpu.memory_space<vmem>>, %arg4: memref<10x128xf32, #tpu.memory_space<vmem>>, %arg5: memref<1x128xf32, #tpu.memory_space<vmem>>, %arg6: memref<8x128xf32, #tpu.memory_space<vmem>>) attributes {dimension_semantics = [#tpu.dimension_semantics<parallel>], iteration_bounds = array<i64: 1>, scalar_prefetch = 0 : i64, scratch_operands = 0 : i64, tpu.core_type = #tpu.core_type<tc>, window_params = [{transform_indices = @transform_0, window_bounds = array<i64: 1, 8, 32>}, {pipeline_mode = #tpu.pipeline_mode<synchronous>, transform_indices = @transform_1, window_bounds = array<i64: 32, 10>}, {pipeline_mode = #tpu.pipeline_mode<synchronous>, transform_indices = @transform_2, window_bounds = array<i64: 1, 10>}, {transform_indices = @transform_3, window_bounds = array<i64: 10, 128>}, {transform_indices = @transform_4, window_bounds = array<i64: 1, 128>}, {transform_indices = @transform_5, window_bounds = array<i64: 8, 128>}]} {
    %c0 = arith.constant 0 : index
    %c0_0 = arith.constant 0 : index
    %c0_1 = arith.constant 0 : index
    %0 = vector.load %arg1[%c0, %c0_0, %c0_1] : memref<1x8x32xf32, #tpu.memory_space<vmem>>, vector<1x8x32xf32>
    %1 = vector.shape_cast %0 : vector<1x8x32xf32> to vector<8x32xf32>
    %c0_2 = arith.constant 0 : index
    %c0_3 = arith.constant 0 : index
    %2 = vector.load %arg2[%c0_2, %c0_3] : memref<32x10xf32, #tpu.memory_space<vmem>>, vector<32x10xf32>
    %cst = arith.constant dense<0.000000e+00> : vector<8x10xf32>
    %3 = tpu.matmul %1, %2, %cst {dimension_numbers = #tpu.dot_dimension_numbers<[1], [0], [0], [1], [0, 0, 1, 1], [], []>} : vector<8x32xf32>, vector<32x10xf32>, vector<8x10xf32> -> vector<8x10xf32>
    %c0_4 = arith.constant 0 : index
    %c0_5 = arith.constant 0 : index
    %4 = vector.load %arg3[%c0_4, %c0_5] : memref<1x10xf32, #tpu.memory_space<vmem>>, vector<1x10xf32>
    %5 = vector.broadcast %4 : vector<1x10xf32> to vector<8x10xf32>
    %6 = arith.addf %3, %5 : vector<8x10xf32>
    %cst_6 = arith.constant 0.000000e+00 : f32
    %7 = vector.broadcast %cst_6 : f32 to vector<8x10xf32>
    %8 = arith.maximumf %6, %7 : vector<8x10xf32>
    %c0_7 = arith.constant 0 : index
    %c0_8 = arith.constant 0 : index
    %9 = vector.load %arg4[%c0_7, %c0_8] : memref<10x128xf32, #tpu.memory_space<vmem>>, vector<10x128xf32>
    %cst_9 = arith.constant dense<0.000000e+00> : vector<8x128xf32>
    %10 = tpu.matmul %8, %9, %cst_9 {dimension_numbers = #tpu.dot_dimension_numbers<[1], [0], [0], [1], [0, 0, 1, 1], [], []>} : vector<8x10xf32>, vector<10x128xf32>, vector<8x128xf32> -> vector<8x128xf32>
    %c0_10 = arith.constant 0 : index
    %c0_11 = arith.constant 0 : index
    %11 = vector.load %arg5[%c0_10, %c0_11] : memref<1x128xf32, #tpu.memory_space<vmem>>, vector<1x128xf32>
    %12 = vector.broadcast %11 : vector<1x128xf32> to vector<8x128xf32>
    %13 = arith.addf %10, %12 : vector<8x128xf32>
    %c0_12 = arith.constant 0 : index
    %c0_13 = arith.constant 0 : index
    %14 = vector.load %arg6[%c0_12, %c0_13] : memref<8x128xf32, #tpu.memory_space<vmem>>, vector<8x128xf32>
    tpu.vector_store %arg6[%c0_12, %c0_13], %13 {strides = array<i32>} : memref<8x128xf32, #tpu.memory_space<vmem>>, vector<8x128xf32>,
    return
  }
  func.func @transform_0(%arg0: i32) -> (i32, i32, i32) {
    %c7_i32 = arith.constant 7 : i32
    %c0_i32 = arith.constant 0 : i32
    %c0_i32_0 = arith.constant 0 : i32
    %c0_i32_1 = arith.constant 0 : i32
    return %c7_i32, %c0_i32, %c0_i32_0 : i32, i32, i32
  }
  func.func @transform_1(%arg0: i32) -> (i32, i32) {
    %c0_i32 = arith.constant 0 : i32
    %c0_i32_0 = arith.constant 0 : i32
    %c0_i32_1 = arith.constant 0 : i32
    return %c0_i32, %c0_i32_0 : i32, i32
  }
  func.func @transform_2(%arg0: i32) -> (i32, i32) {
    %c0_i32 = arith.constant 0 : i32
    %c0_i32_0 = arith.constant 0 : i32
    %c0_i32_1 = arith.constant 0 : i32
    return %c0_i32, %c0_i32_0 : i32, i32
  }
  func.func @transform_3(%arg0: i32) -> (i32, i32) {
    %c0_i32 = arith.constant 0 : i32
    %c0_i32_0 = arith.constant 0 : i32
    return %c0_i32, %arg0 : i32, i32
  }
  func.func @transform_4(%arg0: i32) -> (i32, i32) {
    %c0_i32 = arith.constant 0 : i32
    %c0_i32_0 = arith.constant 0 : i32
    return %c0_i32, %arg0 : i32, i32
  }
  func.func @transform_5(%arg0: i32) -> (i32, i32) {
    %c0_i32 = arith.constant 0 : i32
    %c0_i32_0 = arith.constant 0 : i32
    return %c0_i32, %arg0 : i32, i32
  }
}

</mosaic_0001>

<llo_original>
// kernel: tpu_custom_call.1
$region0: #{tpu_custom_call.1}
  #allocation0 [shape = 'u32[]', space=smem, size = 0x4, offset = 0x4, fixed_abs, tag = 'smem constant byte address 0x4 - core index']
  #allocation1 [shape = 'u32[144,128]{1,0:T(1,128)}', space=vmem, size = 0x12000, scoped, tag = 'internal scratch']
  %s0 = inlined_call_operand.hbm [shape: f32[8,8,32], index: 0, kind: input, shape index: {}]
  %s1 = inlined_call_operand.vmem [shape: f32[32,10], index: 1, kind: input, shape index: {}]
  %s2 = inlined_call_operand.vmem [shape: f32[1,10], index: 2, kind: input, shape index: {}]
  %s3 = inlined_call_operand.vmem [shape: f32[10,128], index: 3, kind: input, shape index: {}]
  %s4 = inlined_call_operand.vmem [shape: f32[1,128], index: 4, kind: input, shape index: {}]
  %s5 = inlined_call_operand.hbm [shape: f32[8,128], index: 5, kind: output, shape index: {}]
  %s6 = sld [smem:[#allocation0]]
  $region34: #{tpu_custom_call.1} parent=0
    _
  %s8 = ssub.s32 1, %s6
  %s9 = scalar_select 0, %s8, %s6
  $region1: #{tpu_custom_call.1} parent=0
    #allocation2 [shape = 'u8[4096]{0}', space=vmem, size = 0x1000, scoped, tag = 'input window, operand 0, single buffered']
    #allocation3 [shape = 's32[1]{0}', space=sflag, size = 0x4, scoped, tag = 'scoped memory for tpu_custom_call.1']
    #allocation4 [shape = 's32[1]{0}', space=sflag, size = 0x4, scoped, tag = 'scoped memory for tpu_custom_call.1']
    #allocation5 [shape = 'u8[4096]{0}', space=vmem, size = 0x1000, scoped, tag = 'output window, operand 0, single buffered']
    %10 = vsyncpa [#allocation3], 0
    %11 = vsyncpa [#allocation4], 0
    // Predicated region
    $region2: #{tpu_custom_call.1} parent=1 // pred_check
      _
    $region3: #{tpu_custom_call.1} parent=1 // pred_check_branch
      %13 = sbr.rel (0) target = $region5
    $region4: #{tpu_custom_call.1} parent=1 // pred_region
      %s15 = ssub.s32 128, 128
      %16 = vsyncadd [#allocation3], %s15
      %s17 = scalar_lea.hbm %s0, 896
      %s19 = sshll.u32 [#allocation2], 4
      %s20 = int_to_ptr.vmem [resolvable:$true] %s19
      %22 = dma.hbm_to_vmem [thread:$0]  %s17, 128, %s20, [#allocation3]
    $region5: #{tpu_custom_call.1} parent=1 // pred_fallthru
      _
    // Predicated region
    $region6: #{tpu_custom_call.1} parent=1 // pred_check
      _
    $region7: #{tpu_custom_call.1} parent=1 // pred_check_branch
      %24 = sbr.rel (0) target = $region9
    $region8: #{tpu_custom_call.1} parent=1 // pred_region
      _
    $region9: #{tpu_custom_call.1} parent=1 // pred_fallthru
      _
    // Predicated region
    $region10: #{tpu_custom_call.1} parent=1 // pred_check
      _
    $region11: #{tpu_custom_call.1} parent=1 // pred_check_branch
      %26 = sbr.rel (0) target = $region13
    $region12: #{tpu_custom_call.1} parent=1 // pred_region
      _
    $region13: #{tpu_custom_call.1} parent=1 // pred_fallthru
      _
    // Predicated region
    $region14: #{tpu_custom_call.1} parent=1 // pred_check
      _
    $region15: #{tpu_custom_call.1} parent=1 // pred_check_branch
      %28 = sbr.rel (0) target = $region17
    $region16: #{tpu_custom_call.1} parent=1 // pred_region
      _
    $region17: #{tpu_custom_call.1} parent=1 // pred_fallthru
      _
    // Predicated region
    $region18: #{tpu_custom_call.1} parent=1 // pred_check
      _
    $region19: #{tpu_custom_call.1} parent=1 // pred_check_branch
      %30 = sbr.rel (0) target = $region21
    $region20: #{tpu_custom_call.1} parent=1 // pred_region
      _
    $region21: #{tpu_custom_call.1} parent=1 // pred_fallthru
      _
    // Predicated region
    $region22: #{tpu_custom_call.1} parent=1 // pred_check
      _
    $region23: #{tpu_custom_call.1} parent=1 // pred_check_branch
      %32 = sbr.rel (0) target = $region25
    $region24: #{tpu_custom_call.1} parent=1 // pred_region
      %33 = dma.done [#allocation3], 128
    $region25: #{tpu_custom_call.1} parent=1 // pred_fallthru
      _
    %v34 = vld [vmem:[#allocation2] sm:$0xff]
    %v35 = vld [vmem:[%s1] sm:$0xff]
    %v36 = vld [vmem:[%s1 + $0x8] sm:$0xff]
    %v37 = vld [vmem:[%s1 + $0x10] sm:$0xff]
    %v38 = vld [vmem:[%s1 + $0x18] sm:$0xff]
    %v39 = vld [vmem:[%s2] sm:$0x1]
    %v41 = vlaneseq
    %v42 = vshrl.u32 %v41, 7
    %v43 = vsub.s32 0, %v42
    %v44 = vrot.slane %v39, %v43
    %vm46 = vcmask 261120
    %v48 = vsel %vm46, %v34, 0
    %50 = vmatprep.subr.mxu0 0.0
    %51 = vmatpush1.msra.mxu0 0.0
    %52 = vmatprep.subr.mxu0 0.0
    %53 = vmatpush1.msra.mxu0 0.0
    %54 = vmatprep.subr.mxu0 0.0
    %55 = vmatpush1.msra.mxu0 0.0
    %56 = vmatprep.subr.mxu0 0.0
    %57 = vmatpush1.msra.mxu0 0.0
    %58 = vmatprep.subr.mxu0 0.0
    %59 = vmatpush1.msra.mxu0 0.0
    %60 = vmatprep.subr.mxu0 0.0
    %61 = vmatpush1.msra.mxu0 0.0
    %62 = vmatprep.subr.mxu0 0.0
    %63 = vmatpush1.msra.mxu0 0.0
    %64 = vmatprep.subr.mxu0 0.0
    %65 = vmatpush1.msra.mxu0 0.0
    %66 = vmatprep.subr.mxu0 0.0
    %67 = vmatpush1.msra.mxu0 0.0
    %68 = vmatprep.subr.mxu0 0.0
    %69 = vmatpush1.msra.mxu0 0.0
    %70 = vmatprep.subr.mxu0 0.0
    %71 = vmatpush1.msra.mxu0 0.0
    %72 = vmatprep.subr.mxu0 0.0
    %73 = vmatpush1.msra.mxu0 0.0
    %74 = vmatprep.subr.mxu0 0.0
    %75 = vmatpush1.msra.mxu0 %v38
    %76 = vmatprep.subr.mxu0 0.0
    %77 = vmatpush1.msra.mxu0 %v37
    %78 = vmatprep.subr.mxu0 0.0
    %79 = vmatpush1.msra.mxu0 %v36
    %80 = vmatprep.subr.mxu0 0.0
    %81 = vmatpush1.msra.mxu0 %v35
    %82 = vmatprep.subr.mxu0 0.0
    %83 = vmatpush2.msra.mxu0 0.0
    %84 = vmatprep.subr.mxu0 0.0
    %85 = vmatpush2.msra.mxu0 0.0
    %86 = vmatprep.subr.mxu0 0.0
    %87 = vmatpush2.msra.mxu0 0.0
    %88 = vmatprep.subr.mxu0 0.0
    %89 = vmatpush2.msra.mxu0 0.0
    %90 = vmatprep.subr.mxu0 0.0
    %91 = vmatpush2.msra.mxu0 0.0
    %92 = vmatprep.subr.mxu0 0.0
    %93 = vmatpush2.msra.mxu0 0.0
    %94 = vmatprep.subr.mxu0 0.0
    %95 = vmatpush2.msra.mxu0 0.0
    %96 = vmatprep.subr.mxu0 0.0
    %97 = vmatpush2.msra.mxu0 0.0
    %98 = vmatprep.subr.mxu0 0.0
    %99 = vmatpush2.msra.mxu0 0.0
    %100 = vmatprep.subr.mxu0 0.0
    %101 = vmatpush2.msra.mxu0 0.0
    %102 = vmatprep.subr.mxu0 0.0
    %103 = vmatpush2.msra.mxu0 0.0
    %104 = vmatprep.subr.mxu0 0.0
    %105 = vmatpush2.msra.mxu0 0.0
    %106 = vmatprep.subr.mxu0 0.0
    %107 = vmatpush2.msra.mxu0 0.0
    %108 = vmatprep.subr.mxu0 0.0
    %109 = vmatpush2.msra.mxu0 0.0
    %110 = vmatprep.subr.mxu0 0.0
    %111 = vmatpush2.msra.mxu0 0.0
    %112 = vmatprep.subr.mxu0 0.0
    %113 = vmatpush2.msra.mxu0 0.0
    %114 = vmatprep.mubr.f32.mxu0 0.0
    %115 = vmatmul.mubr.f32.gmra.mxu0 %v48
    %v116 = vpop.f32.mrf.mxu0
    %v117 = vadd.f32 %v44, %v116
    %v118 = vpop.f32.mrf.mxu0
    %119 = vdwg.mxu0
    %v120 = vmax.f32 %v117, 0.0
    %v121 = vld [vmem:[%s3] sm:$0xff]
    %v122 = vld [vmem:[%s3 + $0x8] sm:$0x3]
    %v123 = vld [vmem:[%s4] sm:$0x1]
    %v125 = vlaneseq
    %v126 = vshrl.u32 %v125, 7
    %v127 = vsub.s32 0, %v126
    %v128 = vrot.slane %v123, %v127
    %vm130 = vcmask 80896
    %v132 = vsel %vm130, %v120, 0
    %vm134 = vcmask 1041408
    %v136 = vsel %vm134, %v122, 0
    %138 = vmatprep.subr.mxu0 0.0
    %139 = vmatpush1.msra.mxu0 0.0
    %140 = vmatprep.subr.mxu0 0.0
    %141 = vmatpush1.msra.mxu0 0.0
    %142 = vmatprep.subr.mxu0 0.0
    %143 = vmatpush1.msra.mxu0 0.0
    %144 = vmatprep.subr.mxu0 0.0
    %145 = vmatpush1.msra.mxu0 0.0
    %146 = vmatprep.subr.mxu0 0.0
    %147 = vmatpush1.msra.mxu0 0.0
    %148 = vmatprep.subr.mxu0 0.0
    %149 = vmatpush1.msra.mxu0 0.0
    %150 = vmatprep.subr.mxu0 0.0
    %151 = vmatpush1.msra.mxu0 0.0
    %152 = vmatprep.subr.mxu0 0.0
    %153 = vmatpush1.msra.mxu0 0.0
    %154 = vmatprep.subr.mxu0 0.0
    %155 = vmatpush1.msra.mxu0 0.0
    %156 = vmatprep.subr.mxu0 0.0
    %157 = vmatpush1.msra.mxu0 0.0
    %158 = vmatprep.subr.mxu0 0.0
    %159 = vmatpush1.msra.mxu0 0.0
    %160 = vmatprep.subr.mxu0 0.0
    %161 = vmatpush1.msra.mxu0 0.0
    %162 = vmatprep.subr.mxu0 0.0
    %163 = vmatpush1.msra.mxu0 0.0
    %164 = vmatprep.subr.mxu0 0.0
    %165 = vmatpush1.msra.mxu0 0.0
    %166 = vmatprep.subr.mxu0 0.0
    %167 = vmatpush1.msra.mxu0 %v136
    %168 = vmatprep.subr.mxu0 0.0
    %169 = vmatpush1.msra.mxu0 %v121
    %170 = vmatprep.subr.mxu0 0.0
    %171 = vmatpush2.msra.mxu0 0.0
    %172 = vmatprep.subr.mxu0 0.0
    %173 = vmatpush2.msra.mxu0 0.0
    %174 = vmatprep.subr.mxu0 0.0
    %175 = vmatpush2.msra.mxu0 0.0
    %176 = vmatprep.subr.mxu0 0.0
    %177 = vmatpush2.msra.mxu0 0.0
    %178 = vmatprep.subr.mxu0 0.0
    %179 = vmatpush2.msra.mxu0 0.0
    %180 = vmatprep.subr.mxu0 0.0
    %181 = vmatpush2.msra.mxu0 0.0
    %182 = vmatprep.subr.mxu0 0.0
    %183 = vmatpush2.msra.mxu0 0.0
    %184 = vmatprep.subr.mxu0 0.0
    %185 = vmatpush2.msra.mxu0 0.0
    %186 = vmatprep.subr.mxu0 0.0
    %187 = vmatpush2.msra.mxu0 0.0
    %188 = vmatprep.subr.mxu0 0.0
    %189 = vmatpush2.msra.mxu0 0.0
    %190 = vmatprep.subr.mxu0 0.0
    %191 = vmatpush2.msra.mxu0 0.0
    %192 = vmatprep.subr.mxu0 0.0
    %193 = vmatpush2.msra.mxu0 0.0
    %194 = vmatprep.subr.mxu0 0.0
    %195 = vmatpush2.msra.mxu0 0.0
    %196 = vmatprep.subr.mxu0 0.0
    %197 = vmatpush2.msra.mxu0 0.0
    %198 = vmatprep.subr.mxu0 0.0
    %199 = vmatpush2.msra.mxu0 0.0
    %200 = vmatprep.subr.mxu0 0.0
    %201 = vmatpush2.msra.mxu0 0.0
    %202 = vmatprep.mubr.f32.mxu0 0.0
    %203 = vmatmul.mubr.f32.gmra.mxu0 %v132
    %v204 = vpop.f32.mrf.mxu0
    %v205 = vadd.f32 %v128, %v204
    %v206 = vpop.f32.mrf.mxu0
    %207 = vdwg.mxu0
    %208 = vst [vmem:[#allocation5] sm:$0xff] %v205
    // Predicated region
    $region26: #{tpu_custom_call.1} parent=1 // pred_check
      _
    $region27: #{tpu_custom_call.1} parent=1 // pred_check_branch
      %210 = sbr.rel (0) target = $region29
    $region28: #{tpu_custom_call.1} parent=1 // pred_region
      %s212 = ssub.s32 128, 128
      %213 = vsyncadd [#allocation4], %s212
      %s215 = sshll.u32 [#allocation5], 4
      %s216 = int_to_ptr.vmem [resolvable:$true] %s215
      %218 = dma.vmem_to_hbm [thread:$0]  %s216, 128, %s5, [#allocation4]
    $region29: #{tpu_custom_call.1} parent=1 // pred_fallthru
      _
    // Predicated region
    $region30: #{tpu_custom_call.1} parent=1 // pred_check
      _
    $region31: #{tpu_custom_call.1} parent=1 // pred_check_branch
      %220 = sbr.rel (0) target = $region33
    $region32: #{tpu_custom_call.1} parent=1 // pred_region
      %221 = dma.done [#allocation4], 128
    $region33: #{tpu_custom_call.1} parent=1 // pred_fallthru
      _
    %222 = vsyncpa [#allocation3], 1
    %223 = vsyncpa [#allocation4], 1

</llo_original>
